<compile_context>
chip_gen: v6e
topology: v6e:2x2x1
jax: 0.10.0
libtpu: 0.0.40
codegen_flags: <defaults>
</compile_context>

<pallas_src>
import math
import functools

import jax
import jax.numpy as jnp
from jax import lax
from jax.experimental import pallas as pl
from jax.experimental.pallas import tpu as pltpu


_LANES = 128
_SUBLANES = 8
_VMEM_BUDGET_BYTES = 8 * 1024 * 1024     # target double-buffered pipeline footprint
_VMEM_LIMIT_BYTES = 32 * 1024 * 1024     # explicit scoped-VMEM limit: > v5e's 16 MiB
                                         # default, <= v7x's 64 MiB physical per TC


# ----------------------------- kernels ------------------------------------ #

def _broadcast_pe(pe_blk, batch):
    # pe_blk: (ts, D).  The x block is the row-major (ts, B*D) slab, i.e. row s
    # holds [x[s,0,:], x[s,1,:], ...]; tiling pe along the lane axis matches it.
    if batch > 1:
        pe_blk = jnp.concatenate([pe_blk] * batch, axis=-1)
    return pe_blk


def _pe_add_kernel(x_ref, pe_ref, o_ref, *, batch):
    # eval mode: out = x + pe (broadcast over batch); dropout = identity.
    y = x_ref[...].astype(jnp.float32) + _broadcast_pe(pe_ref[...], batch)
    o_ref[...] = y.astype(o_ref.dtype)


def _srl32(v, n):
    # Logical right shift of int32 by a static amount (jnp >> is arithmetic).
    return (v >> n) & jnp.int32((1 << (32 - n)) - 1)


def _pe_add_dropout_kernel(seed_ref, x_ref, pe_ref, o_ref, *, p, batch, block_rows):
    # training mode: out = dropout(x + pe, p) with inverted-dropout scaling.
    y = x_ref[...].astype(jnp.float32) + _broadcast_pe(pe_ref[...], batch)

    # Counter-based PRNG: hash(global element index, seed).  Depends only on the
    # element's global position, so the mask is identical for any tiling.
    shp = y.shape                                   # (ts, B*D)
    row0 = pl.program_id(0) * block_rows            # global row of this block
    r = lax.broadcasted_iota(jnp.int32, shp, 0) + row0
    c = lax.broadcasted_iota(jnp.int32, shp, 1)
    h = (r * jnp.int32(shp[1]) + c) * jnp.int32(-1640531527) + seed_ref[0]
    # murmur3 fmix32 finalizer (wrapping int32 arithmetic is well-defined).
    h = h ^ _srl32(h, 16)
    h = h * jnp.int32(-2048144789)                  # 0x85EBCA6B
    h = h ^ _srl32(h, 13)
    h = h * jnp.int32(-1028477387)                  # 0xC2B2AE35
    h = h ^ _srl32(h, 16)

    # h uniform over [-2^31, 2^31): keep with prob (1-p) via one signed compare.
    thresh = min(int(round(p * (2.0 ** 32))), (1 << 32) - 1) - (1 << 31)
    keep = h >= jnp.int32(thresh)
    scale = jnp.float32(1.0 / (1.0 - p))
    o_ref[...] = jnp.where(keep, y * scale, 0.0).astype(o_ref.dtype)


# --------------------------- parameter setup ------------------------------- #

def make_pe_table(d_model: int, max_len: int) -> jnp.ndarray:
    """Replicates the PyTorch buffer: shape (max_len, 1, d_model), float32."""
    position = jnp.arange(max_len, dtype=jnp.float32)[:, None]          # (L, 1)
    div_term = jnp.exp(
        jnp.arange(0, d_model, 2, dtype=jnp.float32)
        * (-math.log(10000.0) / d_model)
    )                                                                    # (D/2,)
    pe = jnp.zeros((max_len, d_model), dtype=jnp.float32)
    pe = pe.at[:, 0::2].set(jnp.sin(position * div_term))
    pe = pe.at[:, 1::2].set(jnp.cos(position * div_term))
    return pe[:, None, :]                                                # (L, 1, D)


# ------------------------------ wrapper ------------------------------------ #

def _round_up(v, m):
    return -(-v // m) * m


def _choose_block_rows(S, x_cols, pe_cols, itemsize, *, dropout):
    """Sequence rows per block, accounting for lane padding + double buffering."""
    x_row = _round_up(x_cols, _LANES) * itemsize      # one row of the x block
    o_row = _round_up(x_cols, _LANES) * itemsize      # one row of the out block
    pe_row = _round_up(pe_cols, _LANES) * 4           # pe stays f32
    per_row = 2 * (x_row + o_row + pe_row)            # x2: double-buffered pipeline
    if dropout:
        per_row += 2 * _round_up(x_cols, _LANES) * 4  # f32 y / mask temps headroom
    rows = _VMEM_BUDGET_BYTES // max(per_row, 1)
    # Keep a multi-step grid on large inputs (>= ~8 steps for megacore + overlap),
    # but never shrink below 64 rows so per-step overhead stays bounded.
    rows = min(rows, max(pl.cdiv(S, 8), 64))
    rows = min(rows, S)
    if rows >= _SUBLANES:
        rows = (rows // _SUBLANES) * _SUBLANES        # sublane-aligned tiles
    return max(1, rows)


def _launch(kernel, grid, in_specs, out_spec, out_shape, args, *, num_prefetch,
            aliases):
    return pl.pallas_call(
        kernel,
        out_shape=out_shape,
        grid_spec=pltpu.PrefetchScalarGridSpec(
            num_scalar_prefetch=num_prefetch,
            grid=grid,
            in_specs=in_specs,
            out_specs=out_spec,
        ),
        input_output_aliases=aliases,
        compiler_params=pltpu.CompilerParams(
            dimension_semantics=("parallel",),
            vmem_limit_bytes=_VMEM_LIMIT_BYTES,
        ),
    )(*args)


def position_encoding(x, pe, *, dropout_p=0.1, training=False, seed=0,
                      block_rows=None, donate_x=False):
    """x: (S, B, D); pe: (max_len, 1, D) f32. Returns dropout(x + pe[:S], p)."""
    S, B, D = x.shape
    L = pe.shape[0]
    assert L >= S and pe.shape[-1] == D
    apply_dropout = bool(training) and float(dropout_p) > 0.0
    if apply_dropout:
        assert 0.0 < float(dropout_p) < 1.0

    # Free row-major views: x/out as a lane-dense (S, B*D) slab; pe as a tiny
    # (S, D) float32 table (never broadcast or cast in HBM).
    x_slab = x.reshape(S, B * D)
    pe_rows = pe.reshape(L, D)[:S]

    if block_rows is not None:
        ts = max(1, min(int(block_rows), S))
    else:
        ts = _choose_block_rows(S, B * D, D, x.dtype.itemsize,
                                dropout=apply_dropout)

    grid = (pl.cdiv(S, ts),)
    x_spec = pl.BlockSpec((ts, B * D), lambda i, *_: (i, 0))
    pe_spec = pl.BlockSpec((ts, D), lambda i, *_: (i, 0))
    o_spec = pl.BlockSpec((ts, B * D), lambda i, *_: (i, 0))
    out_shape = jax.ShapeDtypeStruct((S, B * D), x.dtype)

    if not apply_dropout:
        kernel = functools.partial(_pe_add_kernel, batch=B)
        out = _launch(kernel, grid, [x_spec, pe_spec], o_spec, out_shape,
                      (x_slab, pe_rows), num_prefetch=0,
                      aliases={0: 0} if donate_x else {})
    else:
        # TODO(synk): plumb input_output_aliases through the scalar-prefetch
        # (training) path as well once the operand-index mapping is verified.
        seed_arr = jnp.asarray([seed], dtype=jnp.int32)
        kernel = functools.partial(_pe_add_dropout_kernel, p=float(dropout_p),
                                   batch=B, block_rows=ts)
        out = _launch(kernel, grid, [x_spec, pe_spec], o_spec, out_shape,
                      (seed_arr, x_slab, pe_rows), num_prefetch=1, aliases={})

    return out.reshape(S, B, D)


# ------------------------------- demo -------------------------------------- #

if __name__ == "__main__":
    key = jax.random.PRNGKey(0)
    k1, k2, k3 = jax.random.split(key, 3)

    # --- Case 1: small d_model, eval mode. -----------------------------------
    S, B, D, L = 8, 2, 32, 64
    x = jax.random.normal(k1, (S, B, D), dtype=jnp.float32)
    pe = make_pe_table(D, L)
    out = jax.block_until_ready(
        position_encoding(x, pe, dropout_p=0.1, training=False))
    ref = x + pe[:S]
    assert out.shape == x.shape and out.dtype == x.dtype
    assert jnp.allclose(out, ref, atol=1e-6, rtol=1e-6), "case1 mismatch"

    # --- Case 2: d_model multiple of 128, multi-step grid (2 steps), eval mode,
    # with x aliased to the output. --------------------------------------------
    S2, B2, D2, L2 = 16, 2, 128, 32
    x2 = jax.random.normal(k2, (S2, B2, D2), dtype=jnp.float32)
    pe2 = make_pe_table(D2, L2)
    ref2 = x2 + pe2[:S2]
    out2 = jax.block_until_ready(
        position_encoding(x2, pe2, training=False, block_rows=8, donate_x=True))
    assert jnp.allclose(out2, ref2, atol=1e-6, rtol=1e-6), "case2 mismatch"

    # --- Case 3: training-mode dropout on a ragged grid (partial last block);
    # every element is either 0 or (x+pe)/(1-p), the drop rate is near p, and
    # the mask is identical across different tilings. ---------------------------
    S3, B3, D3, L3 = 24, 2, 32, 64
    x3 = jax.random.normal(k3, (S3, B3, D3), dtype=jnp.float32)
    pe3 = make_pe_table(D3, L3)
    ref3 = x3 + pe3[:S3]
    p = 0.1
    out3a = jax.block_until_ready(
        position_encoding(x3, pe3, dropout_p=p, training=True, seed=123,
                          block_rows=16))
    out3b = jax.block_until_ready(
        position_encoding(x3, pe3, dropout_p=p, training=True, seed=123,
                          block_rows=8))
    scale = 1.0 / (1.0 - p)
    ok = jnp.all((out3a == 0.0) | (jnp.abs(out3a - ref3 * scale) < 1e-5))
    assert bool(ok), "case3 dropout structure mismatch"
    assert bool(jnp.array_equal(out3a, out3b)), "case3 mask depends on tiling"
    frac = float(jnp.mean((out3a == 0.0).astype(jnp.float32)))
    assert 0.0 < frac < 0.35, "case3 drop rate implausible"

    print("KERNEL_OK")
</pallas_src>

<mosaic_0001>
module attributes {stable_mosaic.version = 11 : i64} {
  func.func @_pe_add_kernel(%arg0: i32, %arg1: memref<8x64xf32, #tpu.memory_space<vmem>>, %arg2: memref<8x32xf32, #tpu.memory_space<vmem>>, %arg3: memref<8x64xf32, #tpu.memory_space<vmem>>) attributes {dimension_semantics = [#tpu.dimension_semantics<parallel>], iteration_bounds = array<i64: 1>, scalar_prefetch = 0 : i64, scratch_operands = 0 : i64, tpu.core_type = #tpu.core_type<tc>, window_params = [{transform_indices = @transform_0, window_bounds = array<i64: 8, 64>}, {transform_indices = @transform_1, window_bounds = array<i64: 8, 32>}, {transform_indices = @transform_2, window_bounds = array<i64: 8, 64>}]} {
    %c0 = arith.constant 0 : index
    %c0_0 = arith.constant 0 : index
    %0 = vector.load %arg1[%c0, %c0_0] : memref<8x64xf32, #tpu.memory_space<vmem>>, vector<8x64xf32>
    %c0_1 = arith.constant 0 : index
    %c0_2 = arith.constant 0 : index
    %1 = vector.load %arg2[%c0_1, %c0_2] : memref<8x32xf32, #tpu.memory_space<vmem>>, vector<8x32xf32>
    %2 = tpu.concatenate %1, %1 in 1 : vector<8x32xf32>, vector<8x32xf32> -> vector<8x64xf32>
    %3 = arith.addf %0, %2 : vector<8x64xf32>
    %c0_3 = arith.constant 0 : index
    %c0_4 = arith.constant 0 : index
    %4 = vector.load %arg3[%c0_3, %c0_4] : memref<8x64xf32, #tpu.memory_space<vmem>>, vector<8x64xf32>
    tpu.vector_store %arg3[%c0_3, %c0_4], %3 {strides = array<i32>} : memref<8x64xf32, #tpu.memory_space<vmem>>, vector<8x64xf32>,
    return
  }
  func.func @transform_0(%arg0: i32) -> (i32, i32) {
    %c0_i32 = arith.constant 0 : i32
    %c0_i32_0 = arith.constant 0 : i32
    return %arg0, %c0_i32 : i32, i32
  }
  func.func @transform_1(%arg0: i32) -> (i32, i32) {
    %c0_i32 = arith.constant 0 : i32
    %c0_i32_0 = arith.constant 0 : i32
    return %arg0, %c0_i32 : i32, i32
  }
  func.func @transform_2(%arg0: i32) -> (i32, i32) {
    %c0_i32 = arith.constant 0 : i32
    %c0_i32_0 = arith.constant 0 : i32
    return %arg0, %c0_i32 : i32, i32
  }
}

</mosaic_0001>

<llo_original>
// kernel: tpu_custom_call.1
$region0: #{tpu_custom_call.1}
  #allocation0 [shape = 'u32[]', space=smem, size = 0x4, offset = 0x4, fixed_abs, tag = 'smem constant byte address 0x4 - core index']
  #allocation1 [shape = 'u32[144,128]{1,0:T(1,128)}', space=vmem, size = 0x12000, scoped, tag = 'internal scratch']
  %s0 = inlined_call_operand.hbm [shape: f32[8,64], index: 0, kind: input, shape index: {}]
  %s1 = inlined_call_operand.hbm [shape: f32[8,32], index: 1, kind: input, shape index: {}]
  %s2 = inlined_call_operand.hbm [shape: f32[8,64], index: 2, kind: output, shape index: {}]
  %s3 = sld [smem:[#allocation0]]
  $region26: #{tpu_custom_call.1} parent=0
    _
  %s5 = ssub.s32 1, %s3
  %s6 = scalar_select 0, %s5, %s3
  $region1: #{tpu_custom_call.1} parent=0
    #allocation2 [shape = 'u8[4096]{0}', space=vmem, size = 0x1000, scoped, tag = 'input window, operand 0, single buffered']
    #allocation3 [shape = 's32[1]{0}', space=sflag, size = 0x4, scoped, tag = 'scoped memory for tpu_custom_call.1']
    #allocation4 [shape = 's32[1]{0}', space=sflag, size = 0x4, scoped, tag = 'scoped memory for tpu_custom_call.1']
    #allocation5 [shape = 'u8[4096]{0}', space=vmem, size = 0x1000, scoped, tag = 'input window, operand 1, single buffered']
    #allocation6 [shape = 's32[1]{0}', space=sflag, size = 0x4, scoped, tag = 'scoped memory for tpu_custom_call.1']
    #allocation7 [shape = 'u8[4096]{0}', space=vmem, size = 0x1000, scoped, tag = 'output window, operand 0, single buffered']
    %7 = vsyncpa [#allocation3], 0
    %8 = vsyncpa [#allocation6], 0
    %9 = vsyncpa [#allocation4], 0
    // Predicated region
    $region2: #{tpu_custom_call.1} parent=1 // pred_check
      _
    $region3: #{tpu_custom_call.1} parent=1 // pred_check_branch
      %11 = sbr.rel (0) target = $region5
    $region4: #{tpu_custom_call.1} parent=1 // pred_region
      %s13 = ssub.s32 128, 128
      %14 = vsyncadd [#allocation3], %s13
      %s16 = sshll.u32 [#allocation2], 4
      %s17 = int_to_ptr.vmem [resolvable:$true] %s16
      %19 = dma.hbm_to_vmem [thread:$0]  %s0, 128, %s17, [#allocation3]
    $region5: #{tpu_custom_call.1} parent=1 // pred_fallthru
      _
    // Predicated region
    $region6: #{tpu_custom_call.1} parent=1 // pred_check
      _
    $region7: #{tpu_custom_call.1} parent=1 // pred_check_branch
      %21 = sbr.rel (0) target = $region9
    $region8: #{tpu_custom_call.1} parent=1 // pred_region
      %s23 = ssub.s32 128, 128
      %24 = vsyncadd [#allocation6], %s23
      %s26 = sshll.u32 [#allocation5], 4
      %s27 = int_to_ptr.vmem [resolvable:$true] %s26
      %29 = dma.hbm_to_vmem [thread:$0]  %s1, 128, %s27, [#allocation6]
    $region9: #{tpu_custom_call.1} parent=1 // pred_fallthru
      _
    // Predicated region
    $region10: #{tpu_custom_call.1} parent=1 // pred_check
      _
    $region11: #{tpu_custom_call.1} parent=1 // pred_check_branch
      %31 = sbr.rel (0) target = $region13
    $region12: #{tpu_custom_call.1} parent=1 // pred_region
      %32 = dma.done [#allocation3], 128
    $region13: #{tpu_custom_call.1} parent=1 // pred_fallthru
      _
    // Predicated region
    $region14: #{tpu_custom_call.1} parent=1 // pred_check
      _
    $region15: #{tpu_custom_call.1} parent=1 // pred_check_branch
      %34 = sbr.rel (0) target = $region17
    $region16: #{tpu_custom_call.1} parent=1 // pred_region
      %35 = dma.done [#allocation6], 128
    $region17: #{tpu_custom_call.1} parent=1 // pred_fallthru
      _
    %v36 = vld [vmem:[#allocation2] sm:$0xff]
    %v37 = vld [vmem:[#allocation5] sm:$0xff]
    %39 = vrot.lane.b32.xlu0 %v37, 32
    %v40 = vpop.permute.xlu0 %39
    %vm42 = vcmask 261120
    %v43 = vsel %vm42, %v37, %v40
    %v44 = vadd.f32 %v36, %v43
    %vm45 = vcmask 523264
    %46 = vst.msk [vmem:[#allocation7] sm:$0xff] %vm45, %v44
    // Predicated region
    $region18: #{tpu_custom_call.1} parent=1 // pred_check
      _
    $region19: #{tpu_custom_call.1} parent=1 // pred_check_branch
      %48 = sbr.rel (0) target = $region21
    $region20: #{tpu_custom_call.1} parent=1 // pred_region
      %s50 = ssub.s32 128, 128
      %51 = vsyncadd [#allocation4], %s50
      %s53 = sshll.u32 [#allocation7], 4
      %s54 = int_to_ptr.vmem [resolvable:$true] %s53
      %56 = dma.vmem_to_hbm [thread:$0]  %s54, 128, %s2, [#allocation4]
    $region21: #{tpu_custom_call.1} parent=1 // pred_fallthru
      _
    // Predicated region
    $region22: #{tpu_custom_call.1} parent=1 // pred_check
      _
    $region23: #{tpu_custom_call.1} parent=1 // pred_check_branch
      %58 = sbr.rel (0) target = $region25
    $region24: #{tpu_custom_call.1} parent=1 // pred_region
      %59 = dma.done [#allocation4], 128
    $region25: #{tpu_custom_call.1} parent=1 // pred_fallthru
      _
    %60 = vsyncpa [#allocation3], 1
    %61 = vsyncpa [#allocation6], 1
    %62 = vsyncpa [#allocation4], 1

</llo_original>
